<compile_context>
chip_gen: v5e
topology: v5e:2x2
jax: 0.10.0
libtpu: 0.0.40
codegen_flags: <defaults>
</compile_context>

<pallas_src>
import functools

import jax
import jax.numpy as jnp
from jax.experimental import pallas as pl
from jax.experimental.pallas import tpu as pltpu


def _cbam_kernel(x_ref, w1_ref, b1_ref, w2_ref, b2_ref, wsp_ref, o_ref, *, ksize):
    # x_ref  : (1, C, H, W)   one batch image (NCHW block)
    # w1_ref : (mid, C)       bottleneck Linear 1 weight (PyTorch layout)
    # b1_ref : (mid, 1)       bottleneck Linear 1 bias (column)
    # w2_ref : (C, mid)       bottleneck Linear 2 weight
    # b2_ref : (C, 1)         bottleneck Linear 2 bias (column)
    # wsp_ref: (2*k*k + 1,)   SMEM: spatial conv weights [(kh*k+kw)*2 + {0:max,1:avg}] + bias
    # o_ref  : (1, C, H, W)
    _, C, H, W = x_ref.shape
    pad = (ksize - 1) // 2

    x = x_ref[0].astype(jnp.float32)                                  # (C, H, W)

    # ---------------- Channel attention ----------------
    # Global spatial avg / max pooling (lane reduce, then sublane reduce).
    avg_p = jnp.mean(jnp.mean(x, axis=2, keepdims=True), axis=1, keepdims=True)  # (C,1,1)
    max_p = jnp.max(jnp.max(x, axis=2, keepdims=True), axis=1, keepdims=True)    # (C,1,1)
    avg_v = avg_p.reshape(C, 1)                                       # (C, 1)
    max_v = max_p.reshape(C, 1)                                       # (C, 1)

    w1 = w1_ref[...].astype(jnp.float32)                              # (mid, C)
    b1 = b1_ref[...].astype(jnp.float32)                              # (mid, 1)
    w2 = w2_ref[...].astype(jnp.float32)                              # (C, mid)
    b2 = b2_ref[...].astype(jnp.float32)                              # (C, 1)

    def bottleneck(v):                                                # (C,1) -> (C,1)
        h = jnp.dot(w1, v, preferred_element_type=jnp.float32) + b1
        h = jnp.maximum(h, 0.0)                                       # ReLU
        return jnp.dot(w2, h, preferred_element_type=jnp.float32) + b2

    chan_att = jax.nn.sigmoid(bottleneck(avg_v) + bottleneck(max_v))  # (C, 1)
    fp = x * chan_att.reshape(C, 1, 1)                                # (C, H, W)

    # ---------------- Spatial attention ----------------
    ch_max = jnp.max(fp, axis=0, keepdims=True)                       # (1, H, W)
    ch_avg = jnp.mean(fp, axis=0, keepdims=True)                      # (1, H, W)

    def replicate_pad(a):                                             # (1,H,W) -> (1,H+2p,W+2p)
        top = a[:, 0:1, :]
        bot = a[:, H - 1:H, :]
        a = jnp.concatenate([top] * pad + [a] + [bot] * pad, axis=1)
        left = a[:, :, 0:1]
        right = a[:, :, W - 1:W]
        a = jnp.concatenate([left] * pad + [a] + [right] * pad, axis=2)
        return a

    mxp = replicate_pad(ch_max)                                       # (1, H+2p, W+2p)
    avp = replicate_pad(ch_avg)

    conv = jnp.zeros((1, H, W), jnp.float32)
    for kh in range(ksize):
        for kw in range(ksize):
            base = (kh * ksize + kw) * 2
            w_m = wsp_ref[base]                                       # scalar (max channel)
            w_a = wsp_ref[base + 1]                                   # scalar (avg channel)
            conv = conv + mxp[:, kh:kh + H, kw:kw + W] * w_m \
                        + avp[:, kh:kh + H, kw:kw + W] * w_a
    conv = conv + wsp_ref[2 * ksize * ksize]                          # conv bias
    spat_att = jax.nn.sigmoid(conv)                                   # (1, H, W)

    out = fp * spat_att                                               # (C, H, W)
    o_ref[0] = out.astype(o_ref.dtype)

    # TODO(synk): the original module also dumps the spatial-attention map to a
    # PNG via torchvision utils.make_grid/save_image; file I/O has no Pallas
    # equivalent and does not affect the returned tensor, so it is skipped.


def cbam_forward(x, w1, b1, w2, b2, w_sp, b_sp):
    """CBAM forward.  x: (B, C, H, W) float32.
    Weights use PyTorch layouts: w1 (mid, C), b1 (mid,), w2 (C, mid), b2 (C,),
    w_sp (1, 2, k, k) [in-channel order: max, avg], b_sp (1,)."""
    B, C, H, W = x.shape
    mid = w1.shape[0]
    k = w_sp.shape[-1]

    b1c = b1.reshape(mid, 1).astype(jnp.float32)
    b2c = b2.reshape(C, 1).astype(jnp.float32)
    # Flatten conv weights to SMEM order (kh, kw, in-channel) and append bias.
    ws_flat = jnp.transpose(w_sp[0], (1, 2, 0)).reshape(-1)           # (k*k*2,)
    ws_all = jnp.concatenate([ws_flat, b_sp.reshape(-1)]).astype(jnp.float32)

    kernel = functools.partial(_cbam_kernel, ksize=k)

    flops = (
        4 * B * H * W * k * k                       # spatial conv MACs * 2
        + 2 * B * 2 * 2 * (C * mid + mid * C)       # bottleneck MLP (avg & max)
        + 12 * B * C * H * W                        # pools + attention multiplies
    )
    transcendentals = B * (C + H * W)               # sigmoids
    bytes_accessed = 2 * B * C * H * W * 4 + (w1.size + w2.size + b1.size
                                              + b2.size + w_sp.size + b_sp.size) * 4

    out = pl.pallas_call(
        kernel,
        out_shape=jax.ShapeDtypeStruct((B, C, H, W), x.dtype),
        grid_spec=pltpu.PrefetchScalarGridSpec(
            num_scalar_prefetch=0,
            grid=(B,),
            in_specs=[
                pl.BlockSpec((1, C, H, W), lambda b: (b, 0, 0, 0)),
                pl.BlockSpec((mid, C), lambda b: (0, 0)),
                pl.BlockSpec((mid, 1), lambda b: (0, 0)),
                pl.BlockSpec((C, mid), lambda b: (0, 0)),
                pl.BlockSpec((C, 1), lambda b: (0, 0)),
                pl.BlockSpec(memory_space=pltpu.MemorySpace.SMEM),
            ],
            out_specs=pl.BlockSpec((1, C, H, W), lambda b: (b, 0, 0, 0)),
        ),
        compiler_params=pltpu.CompilerParams(
            dimension_semantics=("parallel",),
        ),
        cost_estimate=pl.CostEstimate(
            flops=flops,
            transcendentals=transcendentals,
            bytes_accessed=bytes_accessed,
        ),
    )(x, w1.astype(jnp.float32), b1c, w2.astype(jnp.float32), b2c, ws_all)
    return out


def _reference_cbam(x, w1, b1, w2, b2, w_sp, b_sp):
    """Pure-JAX reference for a correctness sanity check."""
    # Channel attention
    avg = jnp.mean(x, axis=(2, 3))                                    # (B, C)
    mx = jnp.max(x, axis=(2, 3))                                      # (B, C)

    def bottleneck(v):
        h = jnp.maximum(v @ w1.T + b1, 0.0)
        return h @ w2.T + b2

    chan = jax.nn.sigmoid(bottleneck(avg) + bottleneck(mx))           # (B, C)
    fp = x * chan[:, :, None, None]

    # Spatial attention
    mxc = jnp.max(fp, axis=1, keepdims=True)                          # (B,1,H,W)
    avc = jnp.mean(fp, axis=1, keepdims=True)                         # (B,1,H,W)
    pool = jnp.concatenate([mxc, avc], axis=1)                        # (B,2,H,W)
    k = w_sp.shape[-1]
    pad = (k - 1) // 2
    poolp = jnp.pad(pool, ((0, 0), (0, 0), (pad, pad), (pad, pad)), mode="edge")
    conv = jax.lax.conv_general_dilated(
        poolp, w_sp, window_strides=(1, 1), padding="VALID",
        dimension_numbers=("NCHW", "OIHW", "NCHW")) + b_sp.reshape(1, 1, 1, 1)
    spat = jax.nn.sigmoid(conv)                                       # (B,1,H,W)
    return fp * spat


if __name__ == "__main__":
    # Small shapes consistent with the module: batch=2, channels=4, spatial=16,
    # reduction_ratio=2 (middle layer = 2), kernel_size=3.
    B, C, H, W = 2, 4, 16, 16
    reduction_ratio = 2
    kernel_size = 3
    mid = int(C / float(reduction_ratio))

    key = jax.random.PRNGKey(0)
    ks = jax.random.split(key, 7)
    x = jax.random.normal(ks[0], (B, C, H, W), dtype=jnp.float32)

    bnd1 = 1.0 / (C ** 0.5)
    w1 = jax.random.uniform(ks[1], (mid, C), minval=-bnd1, maxval=bnd1, dtype=jnp.float32)
    b1 = jax.random.uniform(ks[2], (mid,), minval=-bnd1, maxval=bnd1, dtype=jnp.float32)
    bnd2 = 1.0 / (mid ** 0.5)
    w2 = jax.random.uniform(ks[3], (C, mid), minval=-bnd2, maxval=bnd2, dtype=jnp.float32)
    b2 = jax.random.uniform(ks[4], (C,), minval=-bnd2, maxval=bnd2, dtype=jnp.float32)
    fan_in = 2 * kernel_size * kernel_size
    bndc = 1.0 / (fan_in ** 0.5)
    w_sp = jax.random.uniform(ks[5], (1, 2, kernel_size, kernel_size),
                              minval=-bndc, maxval=bndc, dtype=jnp.float32)
    b_sp = jax.random.uniform(ks[6], (1,), minval=-bndc, maxval=bndc, dtype=jnp.float32)

    out = cbam_forward(x, w1, b1, w2, b2, w_sp, b_sp)
    out = jax.block_until_ready(out)

    ref = _reference_cbam(x, w1, b1, w2, b2, w_sp, b_sp)
    assert out.shape == (B, C, H, W)
    assert jnp.allclose(out, ref, atol=1e-4, rtol=1e-4), "mismatch vs reference"

    print("KERNEL_OK")
</pallas_src>

<mosaic_0001>
module attributes {stable_mosaic.version = 11 : i64} {
  func.func @_cbam_kernel(%arg0: i32, %arg1: memref<1x4x16x16xf32, #tpu.memory_space<vmem>>, %arg2: memref<2x4xf32, #tpu.memory_space<vmem>>, %arg3: memref<2x1xf32, #tpu.memory_space<vmem>>, %arg4: memref<4x2xf32, #tpu.memory_space<vmem>>, %arg5: memref<4x1xf32, #tpu.memory_space<vmem>>, %arg6: memref<19xf32, #tpu.memory_space<smem>>, %arg7: memref<1x4x16x16xf32, #tpu.memory_space<vmem>>) attributes {dimension_semantics = [#tpu.dimension_semantics<parallel>], iteration_bounds = array<i64: 2>, scalar_prefetch = 0 : i64, scratch_operands = 0 : i64, tpu.core_type = #tpu.core_type<tc>, window_params = [{transform_indices = @transform_0, window_bounds = array<i64: 1, 4, 16, 16>}, {pipeline_mode = #tpu.pipeline_mode<synchronous>, transform_indices = @transform_1, window_bounds = array<i64: 2, 4>}, {pipeline_mode = #tpu.pipeline_mode<synchronous>, transform_indices = @transform_2, window_bounds = array<i64: 2, 1>}, {pipeline_mode = #tpu.pipeline_mode<synchronous>, transform_indices = @transform_3, window_bounds = array<i64: 4, 2>}, {pipeline_mode = #tpu.pipeline_mode<synchronous>, transform_indices = @transform_4, window_bounds = array<i64: 4, 1>}, {transform_indices = @transform_5, window_bounds = array<i64: 19>}, {transform_indices = @transform_6, window_bounds = array<i64: 1, 4, 16, 16>}]} {
    %c0 = arith.constant 0 : index
    %c0_0 = arith.constant 0 : index
    %c0_1 = arith.constant 0 : index
    %c0_2 = arith.constant 0 : index
    %0 = vector.load %arg1[%c0, %c0_0, %c0_1, %c0_2] : memref<1x4x16x16xf32, #tpu.memory_space<vmem>>, vector<1x4x16x16xf32>
    %1 = vector.shape_cast %0 : vector<1x4x16x16xf32> to vector<4x16x16xf32>
    %cst = arith.constant dense<0.000000e+00> : vector<4x16xf32>
    %2 = vector.multi_reduction <add>, %1, %cst [2] : vector<4x16x16xf32> to vector<4x16xf32>
    %3 = vector.shape_cast %2 : vector<4x16xf32> to vector<4x16x1xf32>
    %cst_3 = arith.constant 1.600000e+01 : f32
    %4 = vector.broadcast %cst_3 : f32 to vector<4x16x1xf32>
    %5 = arith.divf %3, %4 : vector<4x16x1xf32>
    %cst_4 = arith.constant dense<0.000000e+00> : vector<4x1xf32>
    %6 = vector.multi_reduction <add>, %5, %cst_4 [1] : vector<4x16x1xf32> to vector<4x1xf32>
    %7 = vector.shape_cast %6 : vector<4x1xf32> to vector<4x1x1xf32>
    %cst_5 = arith.constant 1.600000e+01 : f32
    %8 = vector.broadcast %cst_5 : f32 to vector<4x1x1xf32>
    %9 = arith.divf %7, %8 : vector<4x1x1xf32>
    %cst_6 = arith.constant dense<0xFF800000> : vector<4x16xf32>
    %10 = vector.multi_reduction <maximumf>, %1, %cst_6 [2] : vector<4x16x16xf32> to vector<4x16xf32>
    %11 = vector.shape_cast %10 : vector<4x16xf32> to vector<4x16x1xf32>
    %cst_7 = arith.constant dense<0xFF800000> : vector<4x1xf32>
    %12 = vector.multi_reduction <maximumf>, %11, %cst_7 [1] : vector<4x16x1xf32> to vector<4x1xf32>
    %13 = vector.shape_cast %12 : vector<4x1xf32> to vector<4x1x1xf32>
    %14 = vector.shape_cast %9 : vector<4x1x1xf32> to vector<4x1xf32>
    %15 = vector.shape_cast %13 : vector<4x1x1xf32> to vector<4x1xf32>
    %c0_8 = arith.constant 0 : index
    %c0_9 = arith.constant 0 : index
    %16 = vector.load %arg2[%c0_8, %c0_9] : memref<2x4xf32, #tpu.memory_space<vmem>>, vector<2x4xf32>
    %c0_10 = arith.constant 0 : index
    %c0_11 = arith.constant 0 : index
    %17 = vector.load %arg3[%c0_10, %c0_11] : memref<2x1xf32, #tpu.memory_space<vmem>>, vector<2x1xf32>
    %c0_12 = arith.constant 0 : index
    %c0_13 = arith.constant 0 : index
    %18 = vector.load %arg4[%c0_12, %c0_13] : memref<4x2xf32, #tpu.memory_space<vmem>>, vector<4x2xf32>
    %c0_14 = arith.constant 0 : index
    %c0_15 = arith.constant 0 : index
    %19 = vector.load %arg5[%c0_14, %c0_15] : memref<4x1xf32, #tpu.memory_space<vmem>>, vector<4x1xf32>
    %cst_16 = arith.constant dense<0.000000e+00> : vector<2x1xf32>
    %20 = tpu.matmul %16, %14, %cst_16 {dimension_numbers = #tpu.dot_dimension_numbers<[1], [0], [0], [1], [0, 0, 1, 1], [], []>} : vector<2x4xf32>, vector<4x1xf32>, vector<2x1xf32> -> vector<2x1xf32>
    %21 = arith.addf %20, %17 : vector<2x1xf32>
    %cst_17 = arith.constant 0.000000e+00 : f32
    %22 = vector.broadcast %cst_17 : f32 to vector<2x1xf32>
    %23 = arith.maximumf %21, %22 : vector<2x1xf32>
    %cst_18 = arith.constant dense<0.000000e+00> : vector<4x1xf32>
    %24 = tpu.matmul %18, %23, %cst_18 {dimension_numbers = #tpu.dot_dimension_numbers<[1], [0], [0], [1], [0, 0, 1, 1], [], []>} : vector<4x2xf32>, vector<2x1xf32>, vector<4x1xf32> -> vector<4x1xf32>
    %25 = arith.addf %24, %19 : vector<4x1xf32>
    %cst_19 = arith.constant dense<0.000000e+00> : vector<2x1xf32>
    %26 = tpu.matmul %16, %15, %cst_19 {dimension_numbers = #tpu.dot_dimension_numbers<[1], [0], [0], [1], [0, 0, 1, 1], [], []>} : vector<2x4xf32>, vector<4x1xf32>, vector<2x1xf32> -> vector<2x1xf32>
    %27 = arith.addf %26, %17 : vector<2x1xf32>
    %cst_20 = arith.constant 0.000000e+00 : f32
    %28 = vector.broadcast %cst_20 : f32 to vector<2x1xf32>
    %29 = arith.maximumf %27, %28 : vector<2x1xf32>
    %cst_21 = arith.constant dense<0.000000e+00> : vector<4x1xf32>
    %30 = tpu.matmul %18, %29, %cst_21 {dimension_numbers = #tpu.dot_dimension_numbers<[1], [0], [0], [1], [0, 0, 1, 1], [], []>} : vector<4x2xf32>, vector<2x1xf32>, vector<4x1xf32> -> vector<4x1xf32>
    %31 = arith.addf %30, %19 : vector<4x1xf32>
    %32 = arith.addf %25, %31 : vector<4x1xf32>
    %33 = arith.negf %32 : vector<4x1xf32>
    %34 = math.exp %33 : vector<4x1xf32>
    %cst_22 = arith.constant 1.000000e+00 : f32
    %35 = vector.broadcast %cst_22 : f32 to vector<4x1xf32>
    %36 = arith.addf %35, %34 : vector<4x1xf32>
    %37 = arith.divf %35, %36 : vector<4x1xf32>
    %38 = vector.shape_cast %37 : vector<4x1xf32> to vector<4x1x1xf32>
    %39 = vector.broadcast %38 : vector<4x1x1xf32> to vector<4x16x16xf32>
    %40 = arith.mulf %1, %39 : vector<4x16x16xf32>
    %cst_23 = arith.constant dense<0xFF800000> : vector<16x16xf32>
    %41 = vector.multi_reduction <maximumf>, %40, %cst_23 [0] : vector<4x16x16xf32> to vector<16x16xf32>
    %42 = vector.shape_cast %41 : vector<16x16xf32> to vector<1x16x16xf32>
    %cst_24 = arith.constant dense<0.000000e+00> : vector<16x16xf32>
    %43 = vector.multi_reduction <add>, %40, %cst_24 [0] : vector<4x16x16xf32> to vector<16x16xf32>
    %44 = vector.shape_cast %43 : vector<16x16xf32> to vector<1x16x16xf32>
    %cst_25 = arith.constant 4.000000e+00 : f32
    %45 = vector.broadcast %cst_25 : f32 to vector<1x16x16xf32>
    %46 = arith.divf %44, %45 : vector<1x16x16xf32>
    %47 = vector.extract_strided_slice %42 {offsets = [0, 0, 0], sizes = [1, 1, 16], strides = [1, 1, 1]} : vector<1x16x16xf32> to vector<1x1x16xf32>
    %48 = vector.extract_strided_slice %42 {offsets = [0, 15, 0], sizes = [1, 1, 16], strides = [1, 1, 1]} : vector<1x16x16xf32> to vector<1x1x16xf32>
    %49 = tpu.concatenate %47, %42, %48 in 1 : vector<1x1x16xf32>, vector<1x16x16xf32>, vector<1x1x16xf32> -> vector<1x18x16xf32>
    %50 = vector.extract_strided_slice %49 {offsets = [0, 0, 0], sizes = [1, 18, 1], strides = [1, 1, 1]} : vector<1x18x16xf32> to vector<1x18x1xf32>
    %51 = vector.extract_strided_slice %49 {offsets = [0, 0, 15], sizes = [1, 18, 1], strides = [1, 1, 1]} : vector<1x18x16xf32> to vector<1x18x1xf32>
    %52 = tpu.concatenate %50, %49, %51 in 2 : vector<1x18x1xf32>, vector<1x18x16xf32>, vector<1x18x1xf32> -> vector<1x18x18xf32>
    %53 = vector.extract_strided_slice %46 {offsets = [0, 0, 0], sizes = [1, 1, 16], strides = [1, 1, 1]} : vector<1x16x16xf32> to vector<1x1x16xf32>
    %54 = vector.extract_strided_slice %46 {offsets = [0, 15, 0], sizes = [1, 1, 16], strides = [1, 1, 1]} : vector<1x16x16xf32> to vector<1x1x16xf32>
    %55 = tpu.concatenate %53, %46, %54 in 1 : vector<1x1x16xf32>, vector<1x16x16xf32>, vector<1x1x16xf32> -> vector<1x18x16xf32>
    %56 = vector.extract_strided_slice %55 {offsets = [0, 0, 0], sizes = [1, 18, 1], strides = [1, 1, 1]} : vector<1x18x16xf32> to vector<1x18x1xf32>
    %57 = vector.extract_strided_slice %55 {offsets = [0, 0, 15], sizes = [1, 18, 1], strides = [1, 1, 1]} : vector<1x18x16xf32> to vector<1x18x1xf32>
    %58 = tpu.concatenate %56, %55, %57 in 2 : vector<1x18x1xf32>, vector<1x18x16xf32>, vector<1x18x1xf32> -> vector<1x18x18xf32>
    %cst_26 = arith.constant 0.000000e+00 : f32
    %59 = vector.broadcast %cst_26 : f32 to vector<1x16x16xf32>
    %c0_27 = arith.constant 0 : index
    %60 = memref.load %arg6[%c0_27] : memref<19xf32, #tpu.memory_space<smem>>
    %c1 = arith.constant 1 : index
    %61 = memref.load %arg6[%c1] : memref<19xf32, #tpu.memory_space<smem>>
    %62 = vector.extract_strided_slice %52 {offsets = [0, 0, 0], sizes = [1, 16, 16], strides = [1, 1, 1]} : vector<1x18x18xf32> to vector<1x16x16xf32>
    %63 = vector.broadcast %60 : f32 to vector<1x16x16xf32>
    %64 = arith.mulf %62, %63 : vector<1x16x16xf32>
    %65 = arith.addf %59, %64 : vector<1x16x16xf32>
    %66 = vector.extract_strided_slice %58 {offsets = [0, 0, 0], sizes = [1, 16, 16], strides = [1, 1, 1]} : vector<1x18x18xf32> to vector<1x16x16xf32>
    %67 = vector.broadcast %61 : f32 to vector<1x16x16xf32>
    %68 = arith.mulf %66, %67 : vector<1x16x16xf32>
    %69 = arith.addf %65, %68 : vector<1x16x16xf32>
    %c2 = arith.constant 2 : index
    %70 = memref.load %arg6[%c2] : memref<19xf32, #tpu.memory_space<smem>>
    %c3 = arith.constant 3 : index
    %71 = memref.load %arg6[%c3] : memref<19xf32, #tpu.memory_space<smem>>
    %72 = vector.extract_strided_slice %52 {offsets = [0, 0, 1], sizes = [1, 16, 16], strides = [1, 1, 1]} : vector<1x18x18xf32> to vector<1x16x16xf32>
    %73 = vector.broadcast %70 : f32 to vector<1x16x16xf32>
    %74 = arith.mulf %72, %73 : vector<1x16x16xf32>
    %75 = arith.addf %69, %74 : vector<1x16x16xf32>
    %76 = vector.extract_strided_slice %58 {offsets = [0, 0, 1], sizes = [1, 16, 16], strides = [1, 1, 1]} : vector<1x18x18xf32> to vector<1x16x16xf32>
    %77 = vector.broadcast %71 : f32 to vector<1x16x16xf32>
    %78 = arith.mulf %76, %77 : vector<1x16x16xf32>
    %79 = arith.addf %75, %78 : vector<1x16x16xf32>
    %c4 = arith.constant 4 : index
    %80 = memref.load %arg6[%c4] : memref<19xf32, #tpu.memory_space<smem>>
    %c5 = arith.constant 5 : index
    %81 = memref.load %arg6[%c5] : memref<19xf32, #tpu.memory_space<smem>>
    %82 = vector.extract_strided_slice %52 {offsets = [0, 0, 2], sizes = [1, 16, 16], strides = [1, 1, 1]} : vector<1x18x18xf32> to vector<1x16x16xf32>
    %83 = vector.broadcast %80 : f32 to vector<1x16x16xf32>
    %84 = arith.mulf %82, %83 : vector<1x16x16xf32>
    %85 = arith.addf %79, %84 : vector<1x16x16xf32>
    %86 = vector.extract_strided_slice %58 {offsets = [0, 0, 2], sizes = [1, 16, 16], strides = [1, 1, 1]} : vector<1x18x18xf32> to vector<1x16x16xf32>
    %87 = vector.broadcast %81 : f32 to vector<1x16x16xf32>
    %88 = arith.mulf %86, %87 : vector<1x16x16xf32>
    %89 = arith.addf %85, %88 : vector<1x16x16xf32>
    %c6 = arith.constant 6 : index
    %90 = memref.load %arg6[%c6] : memref<19xf32, #tpu.memory_space<smem>>
    %c7 = arith.constant 7 : index
    %91 = memref.load %arg6[%c7] : memref<19xf32, #tpu.memory_space<smem>>
    %92 = vector.extract_strided_slice %52 {offsets = [0, 1, 0], sizes = [1, 16, 16], strides = [1, 1, 1]} : vector<1x18x18xf32> to vector<1x16x16xf32>
    %93 = vector.broadcast %90 : f32 to vector<1x16x16xf32>
    %94 = arith.mulf %92, %93 : vector<1x16x16xf32>
    %95 = arith.addf %89, %94 : vector<1x16x16xf32>
    %96 = vector.extract_strided_slice %58 {offsets = [0, 1, 0], sizes = [1, 16, 16], strides = [1, 1, 1]} : vector<1x18x18xf32> to vector<1x16x16xf32>
    %97 = vector.broadcast %91 : f32 to vector<1x16x16xf32>
    %98 = arith.mulf %96, %97 : vector<1x16x16xf32>
    %99 = arith.addf %95, %98 : vector<1x16x16xf32>
    %c8 = arith.constant 8 : index
    %100 = memref.load %arg6[%c8] : memref<19xf32, #tpu.memory_space<smem>>
    %c9 = arith.constant 9 : index
    %101 = memref.load %arg6[%c9] : memref<19xf32, #tpu.memory_space<smem>>
    %102 = vector.extract_strided_slice %52 {offsets = [0, 1, 1], sizes = [1, 16, 16], strides = [1, 1, 1]} : vector<1x18x18xf32> to vector<1x16x16xf32>
    %103 = vector.broadcast %100 : f32 to vector<1x16x16xf32>
    %104 = arith.mulf %102, %103 : vector<1x16x16xf32>
    %105 = arith.addf %99, %104 : vector<1x16x16xf32>
    %106 = vector.extract_strided_slice %58 {offsets = [0, 1, 1], sizes = [1, 16, 16], strides = [1, 1, 1]} : vector<1x18x18xf32> to vector<1x16x16xf32>
    %107 = vector.broadcast %101 : f32 to vector<1x16x16xf32>
    %108 = arith.mulf %106, %107 : vector<1x16x16xf32>
    %109 = arith.addf %105, %108 : vector<1x16x16xf32>
    %c10 = arith.constant 10 : index
    %110 = memref.load %arg6[%c10] : memref<19xf32, #tpu.memory_space<smem>>
    %c11 = arith.constant 11 : index
    %111 = memref.load %arg6[%c11] : memref<19xf32, #tpu.memory_space<smem>>
    %112 = vector.extract_strided_slice %52 {offsets = [0, 1, 2], sizes = [1, 16, 16], strides = [1, 1, 1]} : vector<1x18x18xf32> to vector<1x16x16xf32>
    %113 = vector.broadcast %110 : f32 to vector<1x16x16xf32>
    %114 = arith.mulf %112, %113 : vector<1x16x16xf32>
    %115 = arith.addf %109, %114 : vector<1x16x16xf32>
    %116 = vector.extract_strided_slice %58 {offsets = [0, 1, 2], sizes = [1, 16, 16], strides = [1, 1, 1]} : vector<1x18x18xf32> to vector<1x16x16xf32>
    %117 = vector.broadcast %111 : f32 to vector<1x16x16xf32>
    %118 = arith.mulf %116, %117 : vector<1x16x16xf32>
    %119 = arith.addf %115, %118 : vector<1x16x16xf32>
    %c12 = arith.constant 12 : index
    %120 = memref.load %arg6[%c12] : memref<19xf32, #tpu.memory_space<smem>>
    %c13 = arith.constant 13 : index
    %121 = memref.load %arg6[%c13] : memref<19xf32, #tpu.memory_space<smem>>
    %122 = vector.extract_strided_slice %52 {offsets = [0, 2, 0], sizes = [1, 16, 16], strides = [1, 1, 1]} : vector<1x18x18xf32> to vector<1x16x16xf32>
    %123 = vector.broadcast %120 : f32 to vector<1x16x16xf32>
    %124 = arith.mulf %122, %123 : vector<1x16x16xf32>
    %125 = arith.addf %119, %124 : vector<1x16x16xf32>
    %126 = vector.extract_strided_slice %58 {offsets = [0, 2, 0], sizes = [1, 16, 16], strides = [1, 1, 1]} : vector<1x18x18xf32> to vector<1x16x16xf32>
    %127 = vector.broadcast %121 : f32 to vector<1x16x16xf32>
    %128 = arith.mulf %126, %127 : vector<1x16x16xf32>
    %129 = arith.addf %125, %128 : vector<1x16x16xf32>
    %c14 = arith.constant 14 : index
    %130 = memref.load %arg6[%c14] : memref<19xf32, #tpu.memory_space<smem>>
    %c15 = arith.constant 15 : index
    %131 = memref.load %arg6[%c15] : memref<19xf32, #tpu.memory_space<smem>>
    %132 = vector.extract_strided_slice %52 {offsets = [0, 2, 1], sizes = [1, 16, 16], strides = [1, 1, 1]} : vector<1x18x18xf32> to vector<1x16x16xf32>
    %133 = vector.broadcast %130 : f32 to vector<1x16x16xf32>
    %134 = arith.mulf %132, %133 : vector<1x16x16xf32>
    %135 = arith.addf %129, %134 : vector<1x16x16xf32>
    %136 = vector.extract_strided_slice %58 {offsets = [0, 2, 1], sizes = [1, 16, 16], strides = [1, 1, 1]} : vector<1x18x18xf32> to vector<1x16x16xf32>
    %137 = vector.broadcast %131 : f32 to vector<1x16x16xf32>
    %138 = arith.mulf %136, %137 : vector<1x16x16xf32>
    %139 = arith.addf %135, %138 : vector<1x16x16xf32>
    %c16 = arith.constant 16 : index
    %140 = memref.load %arg6[%c16] : memref<19xf32, #tpu.memory_space<smem>>
    %c17 = arith.constant 17 : index
    %141 = memref.load %arg6[%c17] : memref<19xf32, #tpu.memory_space<smem>>
    %142 = vector.extract_strided_slice %52 {offsets = [0, 2, 2], sizes = [1, 16, 16], strides = [1, 1, 1]} : vector<1x18x18xf32> to vector<1x16x16xf32>
    %143 = vector.broadcast %140 : f32 to vector<1x16x16xf32>
    %144 = arith.mulf %142, %143 : vector<1x16x16xf32>
    %145 = arith.addf %139, %144 : vector<1x16x16xf32>
    %146 = vector.extract_strided_slice %58 {offsets = [0, 2, 2], sizes = [1, 16, 16], strides = [1, 1, 1]} : vector<1x18x18xf32> to vector<1x16x16xf32>
    %147 = vector.broadcast %141 : f32 to vector<1x16x16xf32>
    %148 = arith.mulf %146, %147 : vector<1x16x16xf32>
    %149 = arith.addf %145, %148 : vector<1x16x16xf32>
    %c18 = arith.constant 18 : index
    %150 = memref.load %arg6[%c18] : memref<19xf32, #tpu.memory_space<smem>>
    %151 = vector.broadcast %150 : f32 to vector<1x16x16xf32>
    %152 = arith.addf %149, %151 : vector<1x16x16xf32>
    %153 = arith.negf %152 : vector<1x16x16xf32>
    %154 = math.exp %153 : vector<1x16x16xf32>
    %cst_28 = arith.constant 1.000000e+00 : f32
    %155 = vector.broadcast %cst_28 : f32 to vector<1x16x16xf32>
    %156 = arith.addf %155, %154 : vector<1x16x16xf32>
    %157 = arith.divf %155, %156 : vector<1x16x16xf32>
    %158 = vector.broadcast %157 : vector<1x16x16xf32> to vector<4x16x16xf32>
    %159 = arith.mulf %40, %158 : vector<4x16x16xf32>
    %c0_29 = arith.constant 0 : index
    %c0_30 = arith.constant 0 : index
    %c0_31 = arith.constant 0 : index
    %c0_32 = arith.constant 0 : index
    %160 = vector.load %arg7[%c0_29, %c0_30, %c0_31, %c0_32] : memref<1x4x16x16xf32, #tpu.memory_space<vmem>>, vector<1x4x16x16xf32>
    %161 = vector.shape_cast %160 : vector<1x4x16x16xf32> to vector<4x16x16xf32>
    %162 = vector.shape_cast %159 : vector<4x16x16xf32> to vector<1x4x16x16xf32>
    tpu.vector_store %arg7[%c0_29, %c0_30, %c0_31, %c0_32], %162 {strides = array<i32>} : memref<1x4x16x16xf32, #tpu.memory_space<vmem>>, vector<1x4x16x16xf32>,
    return
  }
  func.func @transform_0(%arg0: i32) -> (i32, i32, i32, i32) {
    %c0_i32 = arith.constant 0 : i32
    %c0_i32_0 = arith.constant 0 : i32
    %c0_i32_1 = arith.constant 0 : i32
    %c0_i32_2 = arith.constant 0 : i32
    return %arg0, %c0_i32, %c0_i32_0, %c0_i32_1 : i32, i32, i32, i32
  }
  func.func @transform_1(%arg0: i32) -> (i32, i32) {
    %c0_i32 = arith.constant 0 : i32
    %c0_i32_0 = arith.constant 0 : i32
    %c0_i32_1 = arith.constant 0 : i32
    return %c0_i32, %c0_i32_0 : i32, i32
  }
  func.func @transform_2(%arg0: i32) -> (i32, i32) {
    %c0_i32 = arith.constant 0 : i32
    %c0_i32_0 = arith.constant 0 : i32
    %c0_i32_1 = arith.constant 0 : i32
    return %c0_i32, %c0_i32_0 : i32, i32
  }
  func.func @transform_3(%arg0: i32) -> (i32, i32) {
    %c0_i32 = arith.constant 0 : i32
    %c0_i32_0 = arith.constant 0 : i32
    %c0_i32_1 = arith.constant 0 : i32
    return %c0_i32, %c0_i32_0 : i32, i32
  }
  func.func @transform_4(%arg0: i32) -> (i32, i32) {
    %c0_i32 = arith.constant 0 : i32
    %c0_i32_0 = arith.constant 0 : i32
    %c0_i32_1 = arith.constant 0 : i32
    return %c0_i32, %c0_i32_0 : i32, i32
  }
  func.func @transform_5(%arg0: i32) -> i32 {
    %c0_i32 = arith.constant 0 : i32
    %c0_i32_0 = arith.constant 0 : i32
    return %c0_i32 : i32
  }
  func.func @transform_6(%arg0: i32) -> (i32, i32, i32, i32) {
    %c0_i32 = arith.constant 0 : i32
    %c0_i32_0 = arith.constant 0 : i32
    %c0_i32_1 = arith.constant 0 : i32
    %c0_i32_2 = arith.constant 0 : i32
    return %arg0, %c0_i32, %c0_i32_0, %c0_i32_1 : i32, i32, i32, i32
  }
}

</mosaic_0001>

<llo_original>
// kernel: tpu_custom_call.1
$region0: #{tpu_custom_call.1}
  #allocation0 [shape = 'u32[]', space=smem, size = 0x4, offset = 0x4, fixed_abs, tag = 'smem constant byte address 0x4 - core index']
  #allocation1 [shape = 'u32[72,128]{1,0:T(1,128)}', space=vmem, size = 0x9000, scoped, tag = 'internal scratch']
  %s0 = inlined_call_operand.hbm [shape: f32[2,4,16,16], index: 0, kind: input, shape index: {}]
  %s1 = inlined_call_operand.vmem [shape: f32[2,4], index: 1, kind: input, shape index: {}]
  %s2 = inlined_call_operand.vmem [shape: f32[2,1], index: 2, kind: input, shape index: {}]
  %s3 = inlined_call_operand.vmem [shape: f32[4,2], index: 3, kind: input, shape index: {}]
  %s4 = inlined_call_operand.vmem [shape: f32[4,1], index: 4, kind: input, shape index: {}]
  %s5 = inlined_call_operand.vmem [shape: f32[19], index: 5, kind: input, shape index: {}]
  %s6 = inlined_call_operand.hbm [shape: f32[2,4,16,16], index: 6, kind: output, shape index: {}]
  %s7 = sld [smem:[#allocation0]]
  $region65: #{tpu_custom_call.1} parent=0
    _
  %s9 = ssub.s32 1, %s7
  %s10 = scalar_select 0, %s9, %s7
  $region1: #{tpu_custom_call.1} parent=0
    #allocation2 [shape = 'u8[65536]{0}', space=vmem, size = 0x10000, scoped, tag = 'input window, operand 0']
    #allocation3 [shape = 's32[2]{0}', space=sflag, size = 0x8, scoped, tag = 'scoped memory for tpu_custom_call.1']
    #allocation4 [shape = 's32[2]{0}', space=sflag, size = 0x8, scoped, tag = 'scoped memory for tpu_custom_call.1']
    #allocation5 [shape = 's32[2]{0}', space=sflag, size = 0x8, scoped, tag = 'scoped memory for tpu_custom_call.1']
    #allocation6 [shape = 'u8[512]{0}', space=smem, size = 0x200, scoped, tag = 'input window, operand 5, single buffered']
    #allocation7 [shape = 'u8[65536]{0}', space=vmem, size = 0x10000, scoped, tag = 'output window, operand 0']
    %11 = vsyncpa [#allocation3], 0
    %s12 = scalar_lea.sflag [#allocation3], 1
    %13 = vsyncpa %s12, 0
    %14 = vsyncpa [#allocation5], 0
    %15 = vsyncpa [#allocation4], 0
    %s16 = scalar_lea.sflag [#allocation4], 1
    %17 = vsyncpa %s16, 0
    loop: start=0, step=1, limit=4
    $region2: #{tpu_custom_call.1} parent=1 // loop_pre_header
      _
    $region3: #{tpu_custom_call.1} parent=1 // loop_header
      %s19 = sphi 0, %s23
      %p20 = scmp.ge.s32.totalorder %s19, 4
      %s29 = sphi 0, %s31
      %s32 = sphi 0, %s29
      %s33 = sphi 0, %s32
      %s49 = sphi 0, %s33
      %s53 = sphi 0, %s53
      %s55 = sphi 0, %s53
      %s56 = sphi 0, %s55
      %s70 = sphi 0, %s56
      %s74 = sphi 0, %s74
      %s76 = sphi 0, %s74
      %s77 = sphi 0, %s76
      %s91 = sphi 0, %s77
      %s95 = sphi 0, %s95
      %s97 = sphi 0, %s95
      %s98 = sphi 0, %s97
      %s112 = sphi 0, %s98
      %s116 = sphi 0, %s116
      %s118 = sphi 0, %s116
      %s119 = sphi 0, %s118
      %s133 = sphi 0, %s119
      %s137 = sphi 0, %s137
      %s139 = sphi 0, %s137
      %s140 = sphi 0, %s139
      %s154 = sphi 0, %s140
      %s160 = sphi 0, %s162
      %s163 = sphi 0, %s160
      %s164 = sphi 0, %s163
      %s180 = sphi 0, %s164
    $region4: #{tpu_custom_call.1} parent=1 // loop_header_branch
      %22 = sbr.rel (%p20) target = $region8
    $region5: #{tpu_custom_call.1} parent=1 // loop_body
      %s24 = ssub.s32 %s19, 1
      %s25 = ssub.s32 %s19, 2
      %s26 = sadd.s32 %s19, 1
      %s27 = ssub.s32 %s19, %s26
      %p28 = scmp.eq.s32.totalorder %s27, 0
      %s30 = sadd.s32 %s29, 1
      %s31 = scalar_select %p28, %s29, %s30
      %p34 = pneg %p28
      %p35 = scmp.eq.s32.totalorder %s19, 1
      %p36 = por %p34, %p35
      %p37 = scmp.ne.s32.totalorder %s29, %s32
      %p38 = scmp.eq.s32.totalorder %s19, 0
      %p39 = por %p37, %p38
      %p40 = scmp.ne.s32.totalorder %s29, %s32
      %p41 = scmp.eq.s32.totalorder %s24, 1
      %p42 = por %p40, %p41
      %p43 = scmp.ne.s32.totalorder %s32, %s33
      %p44 = scmp.eq.s32.totalorder %s24, 0
      %p45 = por %p43, %p44
      %p46 = scmp.ne.s32.totalorder %s32, %s33
      %p47 = scmp.eq.s32.totalorder %s25, 1
      %p48 = por %p46, %p47
      %p50 = scmp.ne.s32.totalorder %s33, %s49
      %p51 = scmp.eq.s32.totalorder %s25, 0
      %p52 = por %p50, %p51
      %s54 = sadd.s32 %s53, 1
      %p57 = scmp.eq.s32.totalorder %s19, 1
      %p58 = scmp.ne.s32.totalorder %s53, %s55
      %p59 = scmp.eq.s32.totalorder %s19, 0
      %p60 = por %p58, %p59
      %p61 = scmp.ne.s32.totalorder %s53, %s55
      %p62 = scmp.eq.s32.totalorder %s24, 1
      %p63 = por %p61, %p62
      %p64 = scmp.ne.s32.totalorder %s55, %s56
      %p65 = scmp.eq.s32.totalorder %s24, 0
      %p66 = por %p64, %p65
      %p67 = scmp.ne.s32.totalorder %s55, %s56
      %p68 = scmp.eq.s32.totalorder %s25, 1
      %p69 = por %p67, %p68
      %p71 = scmp.ne.s32.totalorder %s56, %s70
      %p72 = scmp.eq.s32.totalorder %s25, 0
      %p73 = por %p71, %p72
      %s75 = sadd.s32 %s74, 1
      %p78 = scmp.eq.s32.totalorder %s19, 1
      %p79 = scmp.ne.s32.totalorder %s74, %s76
      %p80 = scmp.eq.s32.totalorder %s19, 0
      %p81 = por %p79, %p80
      %p82 = scmp.ne.s32.totalorder %s74, %s76
      %p83 = scmp.eq.s32.totalorder %s24, 1
      %p84 = por %p82, %p83
      %p85 = scmp.ne.s32.totalorder %s76, %s77
      %p86 = scmp.eq.s32.totalorder %s24, 0
      %p87 = por %p85, %p86
      %p88 = scmp.ne.s32.totalorder %s76, %s77
      %p89 = scmp.eq.s32.totalorder %s25, 1
      %p90 = por %p88, %p89
      %p92 = scmp.ne.s32.totalorder %s77, %s91
      %p93 = scmp.eq.s32.totalorder %s25, 0
      %p94 = por %p92, %p93
      %s96 = sadd.s32 %s95, 1
      %p99 = scmp.eq.s32.totalorder %s19, 1
      %p100 = scmp.ne.s32.totalorder %s95, %s97
      %p101 = scmp.eq.s32.totalorder %s19, 0
      %p102 = por %p100, %p101
      %p103 = scmp.ne.s32.totalorder %s95, %s97
      %p104 = scmp.eq.s32.totalorder %s24, 1
      %p105 = por %p103, %p104
      %p106 = scmp.ne.s32.totalorder %s97, %s98
      %p107 = scmp.eq.s32.totalorder %s24, 0
      %p108 = por %p106, %p107
      %p109 = scmp.ne.s32.totalorder %s97, %s98
      %p110 = scmp.eq.s32.totalorder %s25, 1
      %p111 = por %p109, %p110
      %p113 = scmp.ne.s32.totalorder %s98, %s112
      %p114 = scmp.eq.s32.totalorder %s25, 0
      %p115 = por %p113, %p114
      %s117 = sadd.s32 %s116, 1
      %p120 = scmp.eq.s32.totalorder %s19, 1
      %p121 = scmp.ne.s32.totalorder %s116, %s118
      %p122 = scmp.eq.s32.totalorder %s19, 0
      %p123 = por %p121, %p122
      %p124 = scmp.ne.s32.totalorder %s116, %s118
      %p125 = scmp.eq.s32.totalorder %s24, 1
      %p126 = por %p124, %p125
      %p127 = scmp.ne.s32.totalorder %s118, %s119
      %p128 = scmp.eq.s32.totalorder %s24, 0
      %p129 = por %p127, %p128
      %p130 = scmp.ne.s32.totalorder %s118, %s119
      %p131 = scmp.eq.s32.totalorder %s25, 1
      %p132 = por %p130, %p131
      %p134 = scmp.ne.s32.totalorder %s119, %s133
      %p135 = scmp.eq.s32.totalorder %s25, 0
      %p136 = por %p134, %p135
      %s138 = sadd.s32 %s137, 1
      %p141 = scmp.eq.s32.totalorder %s19, 1
      %p142 = scmp.ne.s32.totalorder %s137, %s139
      %p143 = scmp.eq.s32.totalorder %s19, 0
      %p144 = por %p142, %p143
      %p145 = scmp.ne.s32.totalorder %s137, %s139
      %p146 = scmp.eq.s32.totalorder %s24, 1
      %p147 = por %p145, %p146
      %p148 = scmp.ne.s32.totalorder %s139, %s140
      %p149 = scmp.eq.s32.totalorder %s24, 0
      %p150 = por %p148, %p149
      %p151 = scmp.ne.s32.totalorder %s139, %s140
      %p152 = scmp.eq.s32.totalorder %s25, 1
      %p153 = por %p151, %p152
      %p155 = scmp.ne.s32.totalorder %s140, %s154
      %p156 = scmp.eq.s32.totalorder %s25, 0
      %p157 = por %p155, %p156
      %s158 = ssub.s32 %s19, %s26
      %p159 = scmp.eq.s32.totalorder %s158, 0
      %s161 = sadd.s32 %s160, 1
      %s162 = scalar_select %p159, %s160, %s161
      %p165 = pneg %p159
      %p166 = scmp.eq.s32.totalorder %s19, 1
      %p167 = por %p165, %p166
      %p168 = scmp.ne.s32.totalorder %s160, %s163
      %p169 = scmp.eq.s32.totalorder %s19, 0
      %p170 = por %p168, %p169
      %p171 = scmp.ne.s32.totalorder %s160, %s163
      %p172 = scmp.eq.s32.totalorder %s24, 1
      %p173 = por %p171, %p172
      %p174 = scmp.ne.s32.totalorder %s163, %s164
      %p175 = scmp.eq.s32.totalorder %s24, 0
      %p176 = por %p174, %p175
      %p177 = scmp.ne.s32.totalorder %s163, %s164
      %p178 = scmp.eq.s32.totalorder %s25, 1
      %p179 = por %p177, %p178
      %p181 = scmp.ne.s32.totalorder %s164, %s180
      %p182 = scmp.eq.s32.totalorder %s25, 0
      %p183 = por %p181, %p182
      %p184 = scmp.le.s32.totalorder 1, %s19
      %p185 = scmp.lt.s32.totalorder %s19, 3
      %p186 = pnand %p184, %p185
      %p187 = pneg %p186
      // Predicated region
      $region9: #{tpu_custom_call.1} parent=5 // pred_check
        _
      $region10: #{tpu_custom_call.1} parent=5 // pred_check_branch
        %189 = sbr.rel (%p186) target = $region12
      $region11: #{tpu_custom_call.1} parent=5 // pred_region
        %s190 = ssub.s32 %s19, 1
        // Predicated region
        $region13: #{tpu_custom_call.1} parent=11 // pred_check
          %p191 = pneg %p66
        $region14: #{tpu_custom_call.1} parent=11 // pred_check_branch
          %193 = sbr.rel (%p191) target = $region16
        $region15: #{tpu_custom_call.1} parent=11 // pred_region
          _
        $region16: #{tpu_custom_call.1} parent=11 // pred_fallthru
          _
        // Predicated region
        $region17: #{tpu_custom_call.1} parent=11 // pred_check
          %p194 = pneg %p87
        $region18: #{tpu_custom_call.1} parent=11 // pred_check_branch
          %196 = sbr.rel (%p194) target = $region20
        $region19: #{tpu_custom_call.1} parent=11 // pred_region
          _
        $region20: #{tpu_custom_call.1} parent=11 // pred_fallthru
          _
        // Predicated region
        $region21: #{tpu_custom_call.1} parent=11 // pred_check
          %p197 = pneg %p108
        $region22: #{tpu_custom_call.1} parent=11 // pred_check_branch
          %199 = sbr.rel (%p197) target = $region24
        $region23: #{tpu_custom_call.1} parent=11 // pred_region
          _
        $region24: #{tpu_custom_call.1} parent=11 // pred_fallthru
          _
        // Predicated region
        $region25: #{tpu_custom_call.1} parent=11 // pred_check
          %p200 = pneg %p129
        $region26: #{tpu_custom_call.1} parent=11 // pred_check_branch
          %202 = sbr.rel (%p200) target = $region28
        $region27: #{tpu_custom_call.1} parent=11 // pred_region
          _
        $region28: #{tpu_custom_call.1} parent=11 // pred_fallthru
          _
        // Predicated region
        $region29: #{tpu_custom_call.1} parent=11 // pred_check
          %p203 = pneg %p150
        $region30: #{tpu_custom_call.1} parent=11 // pred_check_branch
          %205 = sbr.rel (%p203) target = $region32
        $region31: #{tpu_custom_call.1} parent=11 // pred_region
          %207 = vsyncadd [#allocation5], 0
          %s209 = sshll.u32 %s5, 4
          %s210 = int_to_ptr.vmem [resolvable:$true] %s209
          %212 = dma.vmem_to_smem %s210, 16, [#allocation6], [#allocation5]
        $region32: #{tpu_custom_call.1} parent=11 // pred_fallthru
          _
      $region12: #{tpu_custom_call.1} parent=5 // pred_fallthru
        _
      %p213 = scmp.lt.s32.totalorder %s19, 2
      // Predicated region
      $region33: #{tpu_custom_call.1} parent=5 // pred_check
        %p214 = pneg %p213
      $region34: #{tpu_custom_call.1} parent=5 // pred_check_branch
        %216 = sbr.rel (%p214) target = $region36
      $region35: #{tpu_custom_call.1} parent=5 // pred_region
        // Predicated region
        $region37: #{tpu_custom_call.1} parent=35 // pred_check
          %p217 = pneg %p39
        $region38: #{tpu_custom_call.1} parent=35 // pred_check_branch
          %219 = sbr.rel (%p217) target = $region40
        $region39: #{tpu_custom_call.1} parent=35 // pred_region
          %s220 = sand.u32 %s29, 1
          %s221 = scalar_lea.sflag [#allocation3], %s220
          %s222 = sand.u32 %s29, 1
          %s223 = smul.addr %s222, 64
          %s224 = scalar_lea.vmem [#allocation2], %s223
          %226 = vsyncadd %s221, 0
          %s227 = smul.addr %s19, 8
          %s228 = smul.addr %s227, 8
          %s229 = scalar_lea.hbm %s0, %s228
          %s230 = sshll.u32 %s229, 4
          %s231 = int_to_ptr.hbm [resolvable:$true] %s230
          %s232 = sshll.u32 %s224, 4
          %s233 = int_to_ptr.vmem [resolvable:$true] %s232
          %238 = dma.hbm_to_vmem [thread:$0]  %s231, 1024, %s233, %s221, 128, 128, 8
        $region40: #{tpu_custom_call.1} parent=35 // pred_fallthru
          _
      $region36: #{tpu_custom_call.1} parent=5 // pred_fallthru
        _
      %p239 = scmp.le.s32.totalorder 1, %s19
      %p240 = scmp.lt.s32.totalorder %s19, 3
      %p241 = pnand %p239, %p240
      %p242 = pneg %p241
      // Predicated region
      $region41: #{tpu_custom_call.1} parent=5 // pred_check
        _
      $region42: #{tpu_custom_call.1} parent=5 // pred_check_branch
        %244 = sbr.rel (%p241) target = $region44
      $region43: #{tpu_custom_call.1} parent=5 // pred_region
        %s245 = ssub.s32 %s19, 1
        %s246 = sand.u32 %s32, 1
        %s247 = scalar_lea.sflag [#allocation3], %s246
        %s248 = sand.u32 %s32, 1
        %s249 = smul.addr %s248, 64
        %s250 = scalar_lea.vmem [#allocation2], %s249
        // Predicated region
        $region45: #{tpu_custom_call.1} parent=43 // pred_check
          %p251 = pneg %p45
        $region46: #{tpu_custom_call.1} parent=43 // pred_check_branch
          %253 = sbr.rel (%p251) target = $region48
        $region47: #{tpu_custom_call.1} parent=43 // pred_region
          %255 = dma.done %s247, 1024
        $region48: #{tpu_custom_call.1} parent=43 // pred_fallthru
          _
        // Predicated region
        $region49: #{tpu_custom_call.1} parent=43 // pred_check
          %p256 = pneg %p150
        $region50: #{tpu_custom_call.1} parent=43 // pred_check_branch
          %258 = sbr.rel (%p256) target = $region52
        $region51: #{tpu_custom_call.1} parent=43 // pred_region
          %260 = dma.done [#allocation5], 16
        $region52: #{tpu_custom_call.1} parent=43 // pred_fallthru
          _
        %261 = sfence
        %s262 = sand.u32 %s32, 1
        %s263 = scalar_lea.sflag [#allocation3], %s262
        %s264 = sand.u32 %s32, 1
        %s265 = smul.addr %s264, 64
        %s266 = scalar_lea.vmem [#allocation2], %s265
        %p267 = pneg %p45
        %p268 = pneg %p42
        %p269 = pneg %p66
        %p270 = pneg %p63
        %p271 = pneg %p87
        %p272 = pneg %p84
        %p273 = pneg %p108
        %p274 = pneg %p105
        %p275 = pneg %p129
        %p276 = pneg %p126
        %p277 = pneg %p150
        %p278 = pneg %p147
        %p279 = pneg %p176
        %p280 = pneg %p173
        %s281 = sand.u32 %s163, 1
        %s282 = scalar_lea.sflag [#allocation4], %s281
        %s283 = sand.u32 %s163, 1
        %s284 = smul.addr %s283, 64
        %s285 = scalar_lea.vmem [#allocation7], %s284
        %v286 = vld [vmem:[%s250] sm:$0xff]
        %v287 = vld [vmem:[%s250 + $0x8] sm:$0xff]
        %v288 = vld [vmem:[%s250 + $0x10] sm:$0xff]
        %v289 = vld [vmem:[%s250 + $0x18] sm:$0xff]
        %v290 = vld [vmem:[%s250 + $0x20] sm:$0xff]
        %v291 = vld [vmem:[%s250 + $0x28] sm:$0xff]
        %v292 = vld [vmem:[%s250 + $0x30] sm:$0xff]
        %v293 = vld [vmem:[%s250 + $0x38] sm:$0xff]
        %vm294 = vcmask 130048
        %v295 = vsel %vm294, %v286, 0.0
        %296 = vadd.xlane.f32.xlu0 %v295
        %v297 = vpop.xlane.xlu0 %296
        %v298 = vsel %vm294, %v287, 0.0
        %299 = vadd.xlane.f32.xlu0 %v298
        %v300 = vpop.xlane.xlu0 %299
        %v301 = vsel %vm294, %v288, 0.0
        %302 = vadd.xlane.f32.xlu0 %v301
        %v303 = vpop.xlane.xlu0 %302
        %v304 = vsel %vm294, %v289, 0.0
        %305 = vadd.xlane.f32.xlu0 %v304
        %v306 = vpop.xlane.xlu0 %305
        %v307 = vsel %vm294, %v290, 0.0
        %308 = vadd.xlane.f32.xlu0 %v307
        %v309 = vpop.xlane.xlu0 %308
        %v310 = vsel %vm294, %v291, 0.0
        %311 = vadd.xlane.f32.xlu0 %v310
        %v312 = vpop.xlane.xlu0 %311
        %v313 = vsel %vm294, %v292, 0.0
        %314 = vadd.xlane.f32.xlu0 %v313
        %v315 = vpop.xlane.xlu0 %314
        %v316 = vsel %vm294, %v293, 0.0
        %317 = vadd.xlane.f32.xlu0 %v316
        %v318 = vpop.xlane.xlu0 %317
        %v319 = vrcp.pop 16.0
        %v320 = vmul.f32 16.0, %v319
        %v321 = vsub.f32 1.0, %v320
        %v322 = vmul.f32 %v319, %v321
        %v323 = vadd.f32 %v319, %v322
        %vm324 = vweird.f32 %v319
        %v325 = vsel %vm324, %v319, %v323
        %v326 = vmul.f32 %v297, %v325
        %v327 = vmul.f32 %v300, %v325
        %v328 = vmul.f32 %v303, %v325
        %v329 = vmul.f32 %v306, %v325
        %v330 = vmul.f32 %v309, %v325
        %v331 = vmul.f32 %v312, %v325
        %v332 = vmul.f32 %v315, %v325
        %v333 = vmul.f32 %v318, %v325
        %v334 = vadd.f32 %v326, %v327
        %v335 = vrot.slane %v334, 4
        %v336 = vadd.f32 %v334, %v335
        %v337 = vrot.slane %v336, 2
        %v338 = vadd.f32 %v336, %v337
        %v339 = vrot.slane %v338, 1
        %v340 = vadd.f32 %v338, %v339
        %v341 = vadd.f32 %v328, %v329
        %v342 = vrot.slane %v341, 4
        %v343 = vadd.f32 %v341, %v342
        %v344 = vrot.slane %v343, 2
        %v345 = vadd.f32 %v343, %v344
        %v346 = vrot.slane %v345, 1
        %v347 = vadd.f32 %v345, %v346
        %v348 = vadd.f32 %v330, %v331
        %v349 = vrot.slane %v348, 4
        %v350 = vadd.f32 %v348, %v349
        %v351 = vrot.slane %v350, 2
        %v352 = vadd.f32 %v350, %v351
        %v353 = vrot.slane %v352, 1
        %v354 = vadd.f32 %v352, %v353
        %v355 = vadd.f32 %v332, %v333
        %v356 = vrot.slane %v355, 4
        %v357 = vadd.f32 %v355, %v356
        %v358 = vrot.slane %v357, 2
        %v359 = vadd.f32 %v357, %v358
        %v360 = vrot.slane %v359, 1
        %v361 = vadd.f32 %v359, %v360
        %v362 = vmul.f32 %v340, %v325
        %v363 = vmul.f32 %v347, %v325
        %v364 = vmul.f32 %v354, %v325
        %v365 = vmul.f32 %v361, %v325
        %v366 = vsel %vm294, %v286, -inf
        %367 = vmax.xlane.f32.xlu0 %v366
        %v368 = vpop.xlane.xlu0 %367
        %v369 = vsel %vm294, %v287, -inf
        %370 = vmax.xlane.f32.xlu0 %v369
        %v371 = vpop.xlane.xlu0 %370
        %v372 = vsel %vm294, %v288, -inf
        %373 = vmax.xlane.f32.xlu0 %v372
        %v374 = vpop.xlane.xlu0 %373
        %v375 = vsel %vm294, %v289, -inf
        %376 = vmax.xlane.f32.xlu0 %v375
        %v377 = vpop.xlane.xlu0 %376
        %v378 = vsel %vm294, %v290, -inf
        %379 = vmax.xlane.f32.xlu0 %v378
        %v380 = vpop.xlane.xlu0 %379
        %v381 = vsel %vm294, %v291, -inf
        %382 = vmax.xlane.f32.xlu0 %v381
        %v383 = vpop.xlane.xlu0 %382
        %v384 = vsel %vm294, %v292, -inf
        %385 = vmax.xlane.f32.xlu0 %v384
        %v386 = vpop.xlane.xlu0 %385
        %v387 = vsel %vm294, %v293, -inf
        %388 = vmax.xlane.f32.xlu0 %v387
        %v389 = vpop.xlane.xlu0 %388
        %v390 = vmax.f32 %v368, %v371
        %v391 = vrot.slane %v390, 4
        %v392 = vmax.f32 %v390, %v391
        %v393 = vrot.slane %v392, 2
        %v394 = vmax.f32 %v392, %v393
        %v395 = vrot.slane %v394, 1
        %v396 = vmax.f32 %v394, %v395
        %v397 = vmax.f32 %v374, %v377
        %v398 = vrot.slane %v397, 4
        %v399 = vmax.f32 %v397, %v398
        %v400 = vrot.slane %v399, 2
        %v401 = vmax.f32 %v399, %v400
        %v402 = vrot.slane %v401, 1
        %v403 = vmax.f32 %v401, %v402
        %v404 = vmax.f32 %v380, %v383
        %v405 = vrot.slane %v404, 4
        %v406 = vmax.f32 %v404, %v405
        %v407 = vrot.slane %v406, 2
        %v408 = vmax.f32 %v406, %v407
        %v409 = vrot.slane %v408, 1
        %v410 = vmax.f32 %v408, %v409
        %v411 = vmax.f32 %v386, %v389
        %v412 = vrot.slane %v411, 4
        %v413 = vmax.f32 %v411, %v412
        %v414 = vrot.slane %v413, 2
        %v415 = vmax.f32 %v413, %v414
        %v416 = vrot.slane %v415, 1
        %v417 = vmax.f32 %v415, %v416
        %v418 = vld [vmem:[%s1] sm:$0x3]
        %v419 = vld [vmem:[%s2] sm:$0x3]
        %v420 = vld [vmem:[%s3] sm:$0xf]
        %v421 = vld [vmem:[%s4] sm:$0xf]
        %vm426 = vcmask 1041409
        %v427 = vsel %vm426, %v363, %v362
        %vm428 = vcmask 1042434
        %v429 = vsel %vm428, %v364, %v427
        %vm430 = vcmask 1043459
        %v431 = vsel %vm430, %v365, %v429
        %vm432 = vcmask 31744
        %v434 = vsel %vm432, %v418, 0
        %vm436 = vcmask 1043456
        %v437 = vsel %vm436, %v431, 0
        %439 = vmatpush.msra.mxu0 0.0
        %440 = vmatpush.msra.mxu0 0.0
        %441 = vmatpush.msra.mxu0 0.0
        %442 = vmatpush.msra.mxu0 0.0
        %443 = vmatpush.msra.mxu0 0.0
        %444 = vmatpush.msra.mxu0 0.0
        %445 = vmatpush.msra.mxu0 0.0
        %446 = vmatpush.msra.mxu0 0.0
        %447 = vmatpush.msra.mxu0 0.0
        %448 = vmatpush.msra.mxu0 0.0
        %449 = vmatpush.msra.mxu0 0.0
        %450 = vmatpush.msra.mxu0 0.0
        %451 = vmatpush.msra.mxu0 0.0
        %452 = vmatpush.msra.mxu0 0.0
        %453 = vmatpush.msra.mxu0 0.0
        %454 = vmatpush.msra.mxu0 %v437
        %455 = vmatmul.f32.gmra.mxu0 %v434
        %v456 = vpop.f32.mrf.mxu0
        %v457 = vadd.f32 %v419, %v456
        %458 = vdwg.mxu0
        %v459 = vmax.f32 %v457, 0.0
        %vm460 = vcmask 15360
        %v462 = vsel %vm460, %v420, 0
        %vm464 = vcmask 1041408
        %v466 = vsel %vm464, %v459, 0
        %468 = vmatpush.msra.mxu0 0.0
        %469 = vmatpush.msra.mxu0 0.0
        %470 = vmatpush.msra.mxu0 0.0
        %471 = vmatpush.msra.mxu0 0.0
        %472 = vmatpush.msra.mxu0 0.0
        %473 = vmatpush.msra.mxu0 0.0
        %474 = vmatpush.msra.mxu0 0.0
        %475 = vmatpush.msra.mxu0 0.0
        %476 = vmatpush.msra.mxu0 0.0
        %477 = vmatpush.msra.mxu0 0.0
        %478 = vmatpush.msra.mxu0 0.0
        %479 = vmatpush.msra.mxu0 0.0
        %480 = vmatpush.msra.mxu0 0.0
        %481 = vmatpush.msra.mxu0 0.0
        %482 = vmatpush.msra.mxu0 0.0
        %483 = vmatpush.msra.mxu0 %v466
        %484 = vmatmul.f32.gmra.mxu0 %v462
        %v485 = vpop.f32.mrf.mxu0
        %v486 = vadd.f32 %v421, %v485
        %487 = vdwg.mxu0
        %v492 = vsel %vm426, %v403, %v396
        %v493 = vsel %vm428, %v410, %v492
        %v494 = vsel %vm430, %v417, %v493
        %v495 = vsel %vm436, %v494, 0
        %497 = vmatpush.msra.mxu0 0.0
        %498 = vmatpush.msra.mxu0 0.0
        %499 = vmatpush.msra.mxu0 0.0
        %500 = vmatpush.msra.mxu0 0.0
        %501 = vmatpush.msra.mxu0 0.0
        %502 = vmatpush.msra.mxu0 0.0
        %503 = vmatpush.msra.mxu0 0.0
        %504 = vmatpush.msra.mxu0 0.0
        %505 = vmatpush.msra.mxu0 0.0
        %506 = vmatpush.msra.mxu0 0.0
        %507 = vmatpush.msra.mxu0 0.0
        %508 = vmatpush.msra.mxu0 0.0
        %509 = vmatpush.msra.mxu0 0.0
        %510 = vmatpush.msra.mxu0 0.0
        %511 = vmatpush.msra.mxu0 0.0
        %512 = vmatpush.msra.mxu0 %v495
        %513 = vmatmul.f32.gmra.mxu0 %v434
        %v514 = vpop.f32.mrf.mxu0
        %v515 = vadd.f32 %v419, %v514
        %516 = vdwg.mxu0
        %v517 = vmax.f32 %v515, 0.0
        %v519 = vsel %vm464, %v517, 0
        %521 = vmatpush.msra.mxu0 0.0
        %522 = vmatpush.msra.mxu0 0.0
        %523 = vmatpush.msra.mxu0 0.0
        %524 = vmatpush.msra.mxu0 0.0
        %525 = vmatpush.msra.mxu0 0.0
        %526 = vmatpush.msra.mxu0 0.0
        %527 = vmatpush.msra.mxu0 0.0
        %528 = vmatpush.msra.mxu0 0.0
        %529 = vmatpush.msra.mxu0 0.0
        %530 = vmatpush.msra.mxu0 0.0
        %531 = vmatpush.msra.mxu0 0.0
        %532 = vmatpush.msra.mxu0 0.0
        %533 = vmatpush.msra.mxu0 0.0
        %534 = vmatpush.msra.mxu0 0.0
        %535 = vmatpush.msra.mxu0 0.0
        %536 = vmatpush.msra.mxu0 %v519
        %537 = vmatmul.f32.gmra.mxu0 %v462
        %v538 = vpop.f32.mrf.mxu0
        %v539 = vadd.f32 %v421, %v538
        %540 = vdwg.mxu0
        %v541 = vadd.f32 %v486, %v539
        %v542 = vxor.u32 %v541, 2147483648
        %v543 = vmul.f32 %v542, 1.442695
        %v544 = vpow.pop %v543
        %v545 = vadd.f32 %v544, 1.0
        %v546 = vrcp.pop %v545
        %v547 = vmul.f32 %v545, %v546
        %v548 = vsub.f32 1.0, %v547
        %v549 = vmul.f32 %v546, %v548
        %v550 = vadd.f32 %v546, %v549
        %vm551 = vweird.f32 %v545
        %vm552 = vweird.f32 %v546
        %vm553 = vmor %vm551, %vm552
        %v554 = vsel %vm553, %v546, %v550
        %v555 = vand.u32 2147483647, %v545
        %vm556 = vcmp.eq.f32.partialorder %v555, 8.507059e+37
        %v557 = vand.u32 %v545, 2147483648
        %v558 = vor.u32 1.1754944e-38, %v557
        %v559 = vsel %vm556, %v558, %v554
        %v560 = vmul.f32 1.0, %v559
        %v562 = vrot.slane %v560, 1
        %v563 = vrot.slane %v560, 2
        %v564 = vrot.slane %v560, 3
        %v565 = vperm.slane %v560, 0
        %v566 = vperm.slane %v562, 0
        %v567 = vperm.slane %v563, 0
        %v568 = vperm.slane %v564, 0
        %569 = vset.pattern.permute.xlu0 0
        %570 = vperm.xlu0 %569, %v565
        %v571 = vpop.permute.xlu0 %570
        %573 = vset.pattern.permute.xlu0 0
        %574 = vperm.xlu0 %573, %v566
        %v575 = vpop.permute.xlu0 %574
        %577 = vset.pattern.permute.xlu0 0
        %578 = vperm.xlu0 %577, %v567
        %v579 = vpop.permute.xlu0 %578
        %581 = vset.pattern.permute.xlu0 0
        %582 = vperm.xlu0 %581, %v568
        %v583 = vpop.permute.xlu0 %582
        %v585 = vmul.f32 %v286, %v571
        %v586 = vmul.f32 %v287, %v571
        %v587 = vmul.f32 %v288, %v575
        %v588 = vmul.f32 %v289, %v575
        %v589 = vmul.f32 %v290, %v579
        %v590 = vmul.f32 %v291, %v579
        %v591 = vmul.f32 %v292, %v583
        %v592 = vmul.f32 %v293, %v583
        %v593 = vsel %vm294, %v585, -inf
        %v594 = vsel %vm294, %v587, -inf
        %v595 = vsel %vm294, %v589, -inf
        %v596 = vmax.f32 %v593, %v595
        %v597 = vsel %vm294, %v591, -inf
        %v598 = vmax.f32 %v594, %v597
        %v599 = vmax.f32 %v596, %v598
        %v600 = vsel %vm294, %v586, -inf
        %v601 = vsel %vm294, %v588, -inf
        %v602 = vsel %vm294, %v590, -inf
        %v603 = vmax.f32 %v600, %v602
        %v604 = vsel %vm294, %v592, -inf
        %v605 = vmax.f32 %v601, %v604
        %v606 = vmax.f32 %v603, %v605
        %v607 = vsel %vm294, %v585, 0.0
        %v608 = vsel %vm294, %v587, 0.0
        %v609 = vadd.f32 %v607, %v608
        %v610 = vsel %vm294, %v589, 0.0
        %v611 = vadd.f32 %v609, %v610
        %v612 = vsel %vm294, %v591, 0.0
        %v613 = vadd.f32 %v611, %v612
        %v614 = vsel %vm294, %v586, 0.0
        %v615 = vsel %vm294, %v588, 0.0
        %v616 = vadd.f32 %v614, %v615
        %v617 = vsel %vm294, %v590, 0.0
        %v618 = vadd.f32 %v616, %v617
        %v619 = vsel %vm294, %v592, 0.0
        %v620 = vadd.f32 %v618, %v619
        %v621 = vrcp.pop 4.0
        %v622 = vmul.f32 4.0, %v621
        %v623 = vsub.f32 1.0, %v622
        %v624 = vmul.f32 %v621, %v623
        %v625 = vadd.f32 %v621, %v624
        %vm626 = vweird.f32 %v621
        %v627 = vsel %vm626, %v621, %v625
        %v628 = vmul.f32 %v613, %v627
        %v629 = vmul.f32 %v620, %v627
        %vm632 = vcmask 1040384
        %v633 = vrot.slane %v599, 7
        %v634 = vrot.slane %v606, 7
        %v635 = vsel %vm632, %v633, %v634
        %v639 = vrot.slane %v606, 6
        %v641 = vsel %vm632, %v599, %v633
        %v642 = vsel %vm632, %v634, %v639
        %645 = vrot.lane.b32.xlu0 %v641, 1
        %v646 = vpop.permute.xlu0 %645
        %647 = vrot.lane.b32.xlu0 %v635, 1
        %v648 = vpop.permute.xlu0 %647
        %649 = vrot.lane.b32.xlu0 %v642, 1
        %v650 = vpop.permute.xlu0 %649
        %654 = vrot.lane.b32.xlu0 %v641, 2
        %v655 = vpop.permute.xlu0 %654
        %656 = vrot.lane.b32.xlu0 %v635, 2
        %v657 = vpop.permute.xlu0 %656
        %658 = vrot.lane.b32.xlu0 %v642, 2
        %v659 = vpop.permute.xlu0 %658
        %vm663 = vcmask 7168
        %v664 = vsel %vm663, %v641, %v646
        %v665 = vsel %vm663, %v635, %v648
        %v666 = vsel %vm663, %v642, %v650
        %vm667 = vcmask 138240
        %v668 = vsel %vm667, %v664, %v655
        %v669 = vsel %vm667, %v665, %v657
        %v670 = vsel %vm667, %v666, %v659
        %v673 = vrot.slane %v628, 7
        %v674 = vrot.slane %v629, 7
        %v675 = vsel %vm632, %v673, %v674
        %v679 = vrot.slane %v629, 6
        %v681 = vsel %vm632, %v628, %v673
        %v682 = vsel %vm632, %v674, %v679
        %685 = vrot.lane.b32.xlu0 %v681, 1
        %v686 = vpop.permute.xlu0 %685
        %687 = vrot.lane.b32.xlu0 %v675, 1
        %v688 = vpop.permute.xlu0 %687
        %689 = vrot.lane.b32.xlu0 %v682, 1
        %v690 = vpop.permute.xlu0 %689
        %694 = vrot.lane.b32.xlu0 %v681, 2
        %v695 = vpop.permute.xlu0 %694
        %696 = vrot.lane.b32.xlu0 %v675, 2
        %v697 = vpop.permute.xlu0 %696
        %698 = vrot.lane.b32.xlu0 %v682, 2
        %v699 = vpop.permute.xlu0 %698
        %v703 = vsel %vm663, %v681, %v686
        %v704 = vsel %vm663, %v675, %v688
        %v705 = vsel %vm663, %v682, %v690
        %v706 = vsel %vm667, %v703, %v695
        %v707 = vsel %vm667, %v704, %v697
        %v708 = vsel %vm667, %v705, %v699
        %s709 = sld [smem:[#allocation6]]
        %s710 = sld [smem:[#allocation6 + $0x1]]
        %v711 = vstv %s709
        %v712 = vmul.f32 %v668, %v711
        %v713 = vmul.f32 %v669, %v711
        %v714 = vadd.f32 %v712, 0.0
        %v715 = vadd.f32 %v713, 0.0
        %v716 = vstv %s710
        %v717 = vmul.f32 %v706, %v716
        %v718 = vmul.f32 %v707, %v716
        %v719 = vadd.f32 %v714, %v717
        %v720 = vadd.f32 %v715, %v718
        %s721 = sld [smem:[#allocation6 + $0x2]]
        %s722 = sld [smem:[#allocation6 + $0x3]]
        %v723 = vstv %s721
        %v724 = vmul.f32 %v668, %v723
        %v725 = vmul.f32 %v669, %v723
        %728 = vrot.lane.b32.xlu0 %v724, 127
        %v729 = vpop.permute.xlu0 %728
        %730 = vrot.lane.b32.xlu0 %v725, 127
        %v731 = vpop.permute.xlu0 %730
        %v734 = vadd.f32 %v719, %v729
        %v735 = vadd.f32 %v720, %v731
        %v736 = vstv %s722
        %v737 = vmul.f32 %v706, %v736
        %v738 = vmul.f32 %v707, %v736
        %741 = vrot.lane.b32.xlu0 %v737, 127
        %v742 = vpop.permute.xlu0 %741
        %743 = vrot.lane.b32.xlu0 %v738, 127
        %v744 = vpop.permute.xlu0 %743
        %v747 = vadd.f32 %v734, %v742
        %v748 = vadd.f32 %v735, %v744
        %s749 = sld [smem:[#allocation6 + $0x4]]
        %s750 = sld [smem:[#allocation6 + $0x5]]
        %v751 = vstv %s749
        %v752 = vmul.f32 %v668, %v751
        %v753 = vmul.f32 %v669, %v751
        %756 = vrot.lane.b32.xlu0 %v752, 126
        %v757 = vpop.permute.xlu0 %756
        %758 = vrot.lane.b32.xlu0 %v753, 126
        %v759 = vpop.permute.xlu0 %758
        %v762 = vadd.f32 %v747, %v757
        %v763 = vadd.f32 %v748, %v759
        %v764 = vstv %s750
        %v765 = vmul.f32 %v706, %v764
        %v766 = vmul.f32 %v707, %v764
        %769 = vrot.lane.b32.xlu0 %v765, 126
        %v770 = vpop.permute.xlu0 %769
        %771 = vrot.lane.b32.xlu0 %v766, 126
        %v772 = vpop.permute.xlu0 %771
        %v775 = vadd.f32 %v762, %v770
        %v776 = vadd.f32 %v763, %v772
        %s777 = sld [smem:[#allocation6 + $0x6]]
        %s778 = sld [smem:[#allocation6 + $0x7]]
        %v779 = vstv %s777
        %v780 = vmul.f32 %v668, %v779
        %v781 = vmul.f32 %v669, %v779
        %v782 = vmul.f32 %v670, %v779
        %vm786 = vcmask 1046528
        %v787 = vrot.slane %v780, 1
        %v788 = vrot.slane %v781, 1
        %v789 = vsel %vm786, %v787, %v788
        %v790 = vrot.slane %v782, 1
        %v791 = vsel %vm786, %v788, %v790
        %v794 = vadd.f32 %v775, %v789
        %v795 = vadd.f32 %v776, %v791
        %v796 = vstv %s778
        %v797 = vmul.f32 %v706, %v796
        %v798 = vmul.f32 %v707, %v796
        %v799 = vmul.f32 %v708, %v796
        %v803 = vrot.slane %v797, 1
        %v804 = vrot.slane %v798, 1
        %v805 = vsel %vm786, %v803, %v804
        %v806 = vrot.slane %v799, 1
        %v807 = vsel %vm786, %v804, %v806
        %v810 = vadd.f32 %v794, %v805
        %v811 = vadd.f32 %v795, %v807
        %s812 = sld [smem:[#allocation6 + $0x8]]
        %s813 = sld [smem:[#allocation6 + $0x9]]
        %v814 = vstv %s812
        %v815 = vmul.f32 %v668, %v814
        %v816 = vmul.f32 %v669, %v814
        %v817 = vmul.f32 %v670, %v814
        %v821 = vrot.slane %v815, 1
        %v822 = vrot.slane %v816, 1
        %v823 = vsel %vm786, %v821, %v822
        %v824 = vrot.slane %v817, 1
        %v825 = vsel %vm786, %v822, %v824
        %826 = vrot.lane.b32.xlu0 %v823, 127
        %v827 = vpop.permute.xlu0 %826
        %828 = vrot.lane.b32.xlu0 %v825, 127
        %v829 = vpop.permute.xlu0 %828
        %v832 = vadd.f32 %v810, %v827
        %v833 = vadd.f32 %v811, %v829
        %v834 = vstv %s813
        %v835 = vmul.f32 %v706, %v834
        %v836 = vmul.f32 %v707, %v834
        %v837 = vmul.f32 %v708, %v834
        %v841 = vrot.slane %v835, 1
        %v842 = vrot.slane %v836, 1
        %v843 = vsel %vm786, %v841, %v842
        %v844 = vrot.slane %v837, 1
        %v845 = vsel %vm786, %v842, %v844
        %846 = vrot.lane.b32.xlu0 %v843, 127
        %v847 = vpop.permute.xlu0 %846
        %848 = vrot.lane.b32.xlu0 %v845, 127
        %v849 = vpop.permute.xlu0 %848
        %v852 = vadd.f32 %v832, %v847
        %v853 = vadd.f32 %v833, %v849
        %s854 = sld [smem:[#allocation6 + $0xa]]
        %s855 = sld [smem:[#allocation6 + $0xb]]
        %v856 = vstv %s854
        %v857 = vmul.f32 %v668, %v856
        %v858 = vmul.f32 %v669, %v856
        %v859 = vmul.f32 %v670, %v856
        %v863 = vrot.slane %v857, 1
        %v864 = vrot.slane %v858, 1
        %v865 = vsel %vm786, %v863, %v864
        %v866 = vrot.slane %v859, 1
        %v867 = vsel %vm786, %v864, %v866
        %868 = vrot.lane.b32.xlu0 %v865, 126
        %v869 = vpop.permute.xlu0 %868
        %870 = vrot.lane.b32.xlu0 %v867, 126
        %v871 = vpop.permute.xlu0 %870
        %v874 = vadd.f32 %v852, %v869
        %v875 = vadd.f32 %v853, %v871
        %v876 = vstv %s855
        %v877 = vmul.f32 %v706, %v876
        %v878 = vmul.f32 %v707, %v876
        %v879 = vmul.f32 %v708, %v876
        %v883 = vrot.slane %v877, 1
        %v884 = vrot.slane %v878, 1
        %v885 = vsel %vm786, %v883, %v884
        %v886 = vrot.slane %v879, 1
        %v887 = vsel %vm786, %v884, %v886
        %888 = vrot.lane.b32.xlu0 %v885, 126
        %v889 = vpop.permute.xlu0 %888
        %890 = vrot.lane.b32.xlu0 %v887, 126
        %v891 = vpop.permute.xlu0 %890
        %v894 = vadd.f32 %v874, %v889
        %v895 = vadd.f32 %v875, %v891
        %s896 = sld [smem:[#allocation6 + $0xc]]
        %s897 = sld [smem:[#allocation6 + $0xd]]
        %v898 = vstv %s896
        %v899 = vmul.f32 %v668, %v898
        %v900 = vmul.f32 %v669, %v898
        %v901 = vmul.f32 %v670, %v898
        %vm905 = vcmask 1045504
        %v906 = vrot.slane %v899, 2
        %v907 = vrot.slane %v900, 2
        %v908 = vsel %vm905, %v906, %v907
        %v909 = vrot.slane %v901, 2
        %v910 = vsel %vm905, %v907, %v909
        %v913 = vadd.f32 %v894, %v908
        %v914 = vadd.f32 %v895, %v910
        %v915 = vstv %s897
        %v916 = vmul.f32 %v706, %v915
        %v917 = vmul.f32 %v707, %v915
        %v918 = vmul.f32 %v708, %v915
        %v922 = vrot.slane %v916, 2
        %v923 = vrot.slane %v917, 2
        %v924 = vsel %vm905, %v922, %v923
        %v925 = vrot.slane %v918, 2
        %v926 = vsel %vm905, %v923, %v925
        %v929 = vadd.f32 %v913, %v924
        %v930 = vadd.f32 %v914, %v926
        %s931 = sld [smem:[#allocation6 + $0xe]]
        %s932 = sld [smem:[#allocation6 + $0xf]]
        %v933 = vstv %s931
        %v934 = vmul.f32 %v668, %v933
        %v935 = vmul.f32 %v669, %v933
        %v936 = vmul.f32 %v670, %v933
        %v940 = vrot.slane %v934, 2
        %v941 = vrot.slane %v935, 2
        %v942 = vsel %vm905, %v940, %v941
        %v943 = vrot.slane %v936, 2
        %v944 = vsel %vm905, %v941, %v943
        %945 = vrot.lane.b32.xlu0 %v942, 127
        %v946 = vpop.permute.xlu0 %945
        %947 = vrot.lane.b32.xlu0 %v944, 127
        %v948 = vpop.permute.xlu0 %947
        %v951 = vadd.f32 %v929, %v946
        %v952 = vadd.f32 %v930, %v948
        %v953 = vstv %s932
        %v954 = vmul.f32 %v706, %v953
        %v955 = vmul.f32 %v707, %v953
        %v956 = vmul.f32 %v708, %v953
        %v960 = vrot.slane %v954, 2
        %v961 = vrot.slane %v955, 2
        %v962 = vsel %vm905, %v960, %v961
        %v963 = vrot.slane %v956, 2
        %v964 = vsel %vm905, %v961, %v963
        %965 = vrot.lane.b32.xlu0 %v962, 127
        %v966 = vpop.permute.xlu0 %965
        %967 = vrot.lane.b32.xlu0 %v964, 127
        %v968 = vpop.permute.xlu0 %967
        %v971 = vadd.f32 %v951, %v966
        %v972 = vadd.f32 %v952, %v968
        %s973 = sld [smem:[#allocation6 + $0x10]]
        %s974 = sld [smem:[#allocation6 + $0x11]]
        %v975 = vstv %s973
        %v976 = vmul.f32 %v668, %v975
        %v977 = vmul.f32 %v669, %v975
        %v978 = vmul.f32 %v670, %v975
        %v982 = vrot.slane %v976, 2
        %v983 = vrot.slane %v977, 2
        %v984 = vsel %vm905, %v982, %v983
        %v985 = vrot.slane %v978, 2
        %v986 = vsel %vm905, %v983, %v985
        %987 = vrot.lane.b32.xlu0 %v984, 126
        %v988 = vpop.permute.xlu0 %987
        %989 = vrot.lane.b32.xlu0 %v986, 126
        %v990 = vpop.permute.xlu0 %989
        %v993 = vadd.f32 %v971, %v988
        %v994 = vadd.f32 %v972, %v990
        %v995 = vstv %s974
        %v996 = vmul.f32 %v706, %v995
        %v997 = vmul.f32 %v707, %v995
        %v998 = vmul.f32 %v708, %v995
        %v1002 = vrot.slane %v996, 2
        %v1003 = vrot.slane %v997, 2
        %v1004 = vsel %vm905, %v1002, %v1003
        %v1005 = vrot.slane %v998, 2
        %v1006 = vsel %vm905, %v1003, %v1005
        %1007 = vrot.lane.b32.xlu0 %v1004, 126
        %v1008 = vpop.permute.xlu0 %1007
        %1009 = vrot.lane.b32.xlu0 %v1006, 126
        %v1010 = vpop.permute.xlu0 %1009
        %v1013 = vadd.f32 %v993, %v1008
        %v1014 = vadd.f32 %v994, %v1010
        %s1015 = sld [smem:[#allocation6 + $0x12]]
        %v1016 = vstv %s1015
        %v1017 = vadd.f32 %v1013, %v1016
        %v1018 = vadd.f32 %v1014, %v1016
        %v1019 = vxor.u32 %v1017, 2147483648
        %v1020 = vxor.u32 %v1018, 2147483648
        %v1021 = vmul.f32 %v1019, 1.442695
        %v1022 = vpow.pop %v1021
        %v1023 = vmul.f32 %v1020, 1.442695
        %v1024 = vpow.pop %v1023
        %v1025 = vadd.f32 %v1022, 1.0
        %v1026 = vadd.f32 %v1024, 1.0
        %v1027 = vrcp.pop %v1025
        %v1028 = vmul.f32 %v1025, %v1027
        %v1029 = vsub.f32 1.0, %v1028
        %v1030 = vmul.f32 %v1027, %v1029
        %v1031 = vadd.f32 %v1027, %v1030
        %vm1032 = vweird.f32 %v1025
        %vm1033 = vweird.f32 %v1027
        %vm1034 = vmor %vm1032, %vm1033
        %v1035 = vsel %vm1034, %v1027, %v1031
        %v1036 = vand.u32 2147483647, %v1025
        %vm1037 = vcmp.eq.f32.partialorder %v1036, 8.507059e+37
        %v1038 = vand.u32 %v1025, 2147483648
        %v1039 = vor.u32 1.1754944e-38, %v1038
        %v1040 = vsel %vm1037, %v1039, %v1035
        %v1041 = vmul.f32 1.0, %v1040
        %v1042 = vrcp.pop %v1026
        %v1043 = vmul.f32 %v1026, %v1042
        %v1044 = vsub.f32 1.0, %v1043
        %v1045 = vmul.f32 %v1042, %v1044
        %v1046 = vadd.f32 %v1042, %v1045
        %vm1047 = vweird.f32 %v1026
        %vm1048 = vweird.f32 %v1042
        %vm1049 = vmor %vm1047, %vm1048
        %v1050 = vsel %vm1049, %v1042, %v1046
        %v1051 = vand.u32 2147483647, %v1026
        %vm1052 = vcmp.eq.f32.partialorder %v1051, 8.507059e+37
        %v1053 = vand.u32 %v1026, 2147483648
        %v1054 = vor.u32 1.1754944e-38, %v1053
        %v1055 = vsel %vm1052, %v1054, %v1050
        %v1056 = vmul.f32 1.0, %v1055
        %v1057 = vmul.f32 %v585, %v1041
        %v1058 = vmul.f32 %v586, %v1056
        %v1059 = vmul.f32 %v587, %v1041
        %v1060 = vmul.f32 %v588, %v1056
        %v1061 = vmul.f32 %v589, %v1041
        %v1062 = vmul.f32 %v590, %v1056
        %v1063 = vmul.f32 %v591, %v1041
        %v1064 = vmul.f32 %v592, %v1056
        %1065 = vst.msk [vmem:[%s285] sm:$0xff] %vm294, %v1057
        %1066 = vst.msk [vmem:[%s285 + $0x8] sm:$0xff] %vm294, %v1058
        %1067 = vst.msk [vmem:[%s285 + $0x10] sm:$0xff] %vm294, %v1059
        %1068 = vst.msk [vmem:[%s285 + $0x18] sm:$0xff] %vm294, %v1060
        %1069 = vst.msk [vmem:[%s285 + $0x20] sm:$0xff] %vm294, %v1061
        %1070 = vst.msk [vmem:[%s285 + $0x28] sm:$0xff] %vm294, %v1062
        %1071 = vst.msk [vmem:[%s285 + $0x30] sm:$0xff] %vm294, %v1063
        %1072 = vst.msk [vmem:[%s285 + $0x38] sm:$0xff] %vm294, %v1064
        %s1073 = sand.u32 %s163, 1
        %s1074 = scalar_lea.sflag [#allocation4], %s1073
        %s1075 = sand.u32 %s163, 1
        %s1076 = smul.addr %s1075, 64
        %s1077 = scalar_lea.vmem [#allocation7], %s1076
        // Predicated region
        $region53: #{tpu_custom_call.1} parent=43 // pred_check
          %p1078 = pneg %p173
        $region54: #{tpu_custom_call.1} parent=43 // pred_check_branch
          %1080 = sbr.rel (%p1078) target = $region56
        $region55: #{tpu_custom_call.1} parent=43 // pred_region
          %1082 = vsyncadd %s1074, 0
          %s1083 = smul.addr %s24, 8
          %s1084 = smul.addr %s1083, 8
          %s1085 = scalar_lea.hbm %s6, %s1084
          %s1086 = sshll.u32 %s1077, 4
          %s1087 = int_to_ptr.vmem [resolvable:$true] %s1086
          %s1088 = sshll.u32 %s1085, 4
          %s1089 = int_to_ptr.hbm [resolvable:$true] %s1088
          %1094 = dma.vmem_to_hbm [thread:$0]  %s1087, 1024, %s1089, %s1074, 128, 128, 8
        $region56: #{tpu_custom_call.1} parent=43 // pred_fallthru
          _
      $region44: #{tpu_custom_call.1} parent=5 // pred_fallthru
        _
      %p1095 = scmp.le.s32.totalorder 2, %s19
      // Predicated region
      $region57: #{tpu_custom_call.1} parent=5 // pred_check
        %p1096 = pneg %p1095
      $region58: #{tpu_custom_call.1} parent=5 // pred_check_branch
        %1098 = sbr.rel (%p1096) target = $region60
      $region59: #{tpu_custom_call.1} parent=5 // pred_region
        %s1099 = ssub.s32 %s19, 2
        // Predicated region
        $region61: #{tpu_custom_call.1} parent=59 // pred_check
          %p1100 = pneg %p179
        $region62: #{tpu_custom_call.1} parent=59 // pred_check_branch
          %1102 = sbr.rel (%p1100) target = $region64
        $region63: #{tpu_custom_call.1} parent=59 // pred_region
          %s1103 = sand.u32 %s164, 1
          %s1104 = scalar_lea.sflag [#allocation4], %s1103
          %s1105 = sand.u32 %s164, 1
          %s1106 = smul.addr %s1105, 64
          %s1107 = scalar_lea.vmem [#allocation7], %s1106
          %1109 = dma.done %s1104, 1024
        $region64: #{tpu_custom_call.1} parent=59 // pred_fallthru
          _
      $region60: #{tpu_custom_call.1} parent=5 // pred_fallthru
        _
    $region6: #{tpu_custom_call.1} parent=1 // loop_footer
      %s23 = sadd.s32 1, %s19
    $region7: #{tpu_custom_call.1} parent=1 // loop_footer_branch
      %18 = sbr.rel target = $region3
    $region8: #{tpu_custom_call.1} parent=1 // loop_exit
      _
    %1110 = vsyncpa [#allocation3], 1
    %s1111 = scalar_lea.sflag [#allocation3], 1
    %1112 = vsyncpa %s1111, 1
    %1113 = vsyncpa [#allocation4], 1
    %s1114 = scalar_lea.sflag [#allocation4], 1
    %1115 = vsyncpa %s1114, 1
    %1116 = vsyncpa [#allocation5], 1
    %s1117 = scalar_lea.sflag [#allocation5], 1
    %1118 = vsyncpa %s1117, 1

</llo_original>
